<compile_context>
chip_gen: v7x
topology: tpu7x:2x2x1
jax: 0.10.0
libtpu: 0.0.40
codegen_flags: <defaults>
</compile_context>

<pallas_src>
import functools

import jax
import jax.numpy as jnp
import numpy as np
from jax.experimental import pallas as pl
from jax.experimental.pallas import tpu as pltpu


# -----------------------------------------------------------------------------
# Pallas kernel: a single lane-dense MXU pass per grid step.
# -----------------------------------------------------------------------------
def _snconv_kernel(x_ref, w_ref, b_ref, o_ref, *, NB, H):
    # x_ref: (NB, H, K)   bf16   halo-expanded lane-dense input, K = KH*(W+2)*Cin
    # w_ref: (K, Lout)    bf16   banded weight, Lout = W*Cout
    # b_ref: (1, Lout)    f32    bias tiled over W
    # o_ref: (NB, H, Lout) f32
    K = x_ref.shape[-1]
    Lout = o_ref.shape[-1]
    a = x_ref[...].reshape(NB * H, K)            # contiguous -> no relayout copy
    acc = jnp.dot(a, w_ref[...], preferred_element_type=jnp.float32)
    acc = acc + b_ref[...]                       # (1, Lout) broadcasts over rows
    o_ref[...] = acc.reshape(NB, H, Lout).astype(o_ref.dtype)


def _banded_weight(w_hwio, W, pw):
    """(KH, KW, Cin, Cout) -> (KH*(W+2*pw)*Cin, W*Cout) banded matrix.

    Wb[kh*Lin + (w+kw)*Cin + ci, w*Cout + co] = w_hwio[kh, kw, ci, co]
    with Lin = (W+2*pw)*Cin.
    """
    KH, KW, Cin, Cout = w_hwio.shape
    Lin = (W + 2 * pw) * Cin
    eye_w = jnp.eye(W, dtype=w_hwio.dtype)
    mats = []
    for kh in range(KH):
        m = jnp.zeros((Lin, W * Cout), dtype=w_hwio.dtype)
        for kw in range(KW):
            blk = jnp.kron(eye_w, w_hwio[kh, kw])        # (W*Cin, W*Cout)
            m = m.at[kw * Cin:kw * Cin + W * Cin, :].add(blk)
        mats.append(m)
    return jnp.concatenate(mats, axis=0)                  # (KH*Lin, W*Cout)


def conv2d_same_pallas(x_nhwc, w_hwio, bias, *, nb=None):
    """'same' conv, stride 1. x_nhwc: (N,H,W,Cin); w_hwio: (KH,KW,Cin,Cout)."""
    N, H, W, Cin = x_nhwc.shape
    KH, KW, _, Cout = w_hwio.shape
    ph, pw = KH // 2, KW // 2
    Lin = (W + 2 * pw) * Cin
    K = KH * Lin
    Lout = W * Cout

    # Batch elements per grid step: 2 grid steps when possible (keeps both v7x
    # TensorCores busy via the "parallel" grid axis), otherwise one step.
    if nb is None:
        nb = N // 2 if (N >= 2 and N % 2 == 0) else N
    assert N % nb == 0
    grid = (N // nb,)

    # Lane-dense padded input, then halo-expand over the KH taps so the kernel
    # needs only one matmul and no in-kernel slicing.
    x_pad = jnp.pad(x_nhwc, ((0, 0), (ph, ph), (pw, pw), (0, 0)))
    x_flat = x_pad.reshape(N, H + 2 * ph, Lin).astype(jnp.bfloat16)
    x_im = jnp.concatenate(
        [x_flat[:, kh:kh + H, :] for kh in range(KH)], axis=-1)  # (N, H, K)

    wb = _banded_weight(w_hwio, W, pw).astype(jnp.bfloat16)       # (K, Lout)
    b_wide = jnp.tile(bias.astype(jnp.float32), W).reshape(1, Lout)

    kernel = functools.partial(_snconv_kernel, NB=nb, H=H)

    flops = 2 * N * H * W * Cin * Cout * KH * KW
    bytes_accessed = (x_im.size * 2 + wb.size * 2 + b_wide.size * 4
                      + N * H * Lout * 4)

    y_flat = pl.pallas_call(
        kernel,
        out_shape=jax.ShapeDtypeStruct((N, H, Lout), jnp.float32),
        grid_spec=pltpu.PrefetchScalarGridSpec(
            num_scalar_prefetch=0,
            grid=grid,
            in_specs=[
                pl.BlockSpec((nb, H, K), lambda n: (n, 0, 0)),
                pl.BlockSpec((K, Lout), lambda n: (0, 0)),
                pl.BlockSpec((1, Lout), lambda n: (0, 0)),
            ],
            out_specs=pl.BlockSpec((nb, H, Lout), lambda n: (n, 0, 0)),
        ),
        compiler_params=pltpu.CompilerParams(
            dimension_semantics=("parallel",)),
        cost_estimate=pl.CostEstimate(
            flops=flops, transcendentals=0, bytes_accessed=bytes_accessed),
    )(x_im, wb, b_wide)

    return y_flat.reshape(N, H, W, Cout)


# -----------------------------------------------------------------------------
# Spectral normalization (parameter setup, plain JAX): one power iteration on
# W_mat = weight.reshape(Cout, Cin*KH*KW), matching torch spectral_norm's
# training-mode forward with n_power_iterations=1 and eps=sn_eps (1e-4 here,
# as passed by SNConv).
# -----------------------------------------------------------------------------
def _l2_normalize(v, eps):
    return v / jnp.maximum(jnp.linalg.norm(v), eps)


def spectral_normalize_weight(weight_oihw, u, eps=1e-4):
    Cout = weight_oihw.shape[0]
    w_mat = weight_oihw.reshape(Cout, -1)          # (Cout, Cin*KH*KW)
    v = _l2_normalize(w_mat.T @ u, eps)            # (Cin*KH*KW,)
    u_new = _l2_normalize(w_mat @ v, eps)          # (Cout,)
    sigma = jnp.dot(u_new, w_mat @ v)
    return weight_oihw / sigma, u_new


# -----------------------------------------------------------------------------
# SNConv forward (conv_type='standard', kernel_size=3, stride=1, padding=1).
# Returns (y, u_new); thread u_new back in on the next call to mirror
# PyTorch's persistent power-iteration buffer.
# TODO(synk): conv_type='3d', use_mobilenet depthwise/pointwise path and
# stride != 1 are not implemented (module defaults only).
# -----------------------------------------------------------------------------
def snconv_forward(x_nchw, weight_oihw, bias, u, sn_eps=1e-4):
    w_sn, u_new = spectral_normalize_weight(weight_oihw, u, eps=sn_eps)
    w_hwio = jnp.transpose(w_sn, (2, 3, 1, 0))     # OIHW -> HWIO
    x_nhwc = jnp.transpose(x_nchw, (0, 2, 3, 1)).astype(jnp.float32)
    y_nhwc = conv2d_same_pallas(x_nhwc, w_hwio, bias)
    return jnp.transpose(y_nhwc, (0, 3, 1, 2)), u_new   # back to NCHW


if __name__ == "__main__":
    # SNConv(in_channels=4, out_channels=8) at small deterministic shapes.
    N, Cin, H, W = 2, 4, 16, 16
    Cout, KH, KW = 8, 3, 3

    key = jax.random.PRNGKey(0)
    kx, kw_, kb, ku = jax.random.split(key, 4)

    x = jax.random.normal(kx, (N, Cin, H, W), dtype=jnp.float32)
    fan_in = Cin * KH * KW
    weight = jax.random.normal(kw_, (Cout, Cin, KH, KW), jnp.float32) / jnp.sqrt(fan_in)
    bias = jax.random.uniform(
        kb, (Cout,), jnp.float32, -1.0 / jnp.sqrt(fan_in), 1.0 / jnp.sqrt(fan_in)
    )
    u0 = jax.random.normal(ku, (Cout,), jnp.float32)
    u0 = u0 / jnp.maximum(jnp.linalg.norm(u0), 1e-4)

    out, u1 = jax.jit(snconv_forward)(x, weight, bias, u0)
    out = jax.block_until_ready(out)
    assert out.shape == (N, Cout, H, W), out.shape
    assert u1.shape == (Cout,)

    # Sanity check vs XLA conv on the same spectrally-normalized, bf16-cast
    # operands (the kernel uses bf16 MXU operands with f32 accumulation).
    w_sn, _ = spectral_normalize_weight(weight, u0)
    x_bf = x.astype(jnp.bfloat16).astype(jnp.float32)
    w_bf = w_sn.astype(jnp.bfloat16).astype(jnp.float32)
    ref = jax.lax.conv_general_dilated(
        x_bf, w_bf, window_strides=(1, 1), padding=((1, 1), (1, 1)),
        dimension_numbers=("NCHW", "OIHW", "NCHW"),
    ) + bias.reshape(1, Cout, 1, 1)
    np.testing.assert_allclose(np.asarray(out), np.asarray(ref),
                               rtol=1e-3, atol=1e-3)

    print("KERNEL_OK")
</pallas_src>

<mosaic_0001>
module attributes {stable_mosaic.version = 11 : i64} {
  func.func @_snconv_kernel(%arg0: i32, %arg1: memref<1x16x216xbf16, #tpu.memory_space<vmem>>, %arg2: memref<216x128xbf16, #tpu.memory_space<vmem>>, %arg3: memref<1x128xf32, #tpu.memory_space<vmem>>, %arg4: memref<1x16x128xf32, #tpu.memory_space<vmem>>) attributes {dimension_semantics = [#tpu.dimension_semantics<parallel>], iteration_bounds = array<i64: 2>, scalar_prefetch = 0 : i64, scratch_operands = 0 : i64, tpu.core_type = #tpu.core_type<tc>, window_params = [{transform_indices = @transform_0, window_bounds = array<i64: 1, 16, 216>}, {pipeline_mode = #tpu.pipeline_mode<synchronous>, transform_indices = @transform_1, window_bounds = array<i64: 216, 128>}, {pipeline_mode = #tpu.pipeline_mode<synchronous>, transform_indices = @transform_2, window_bounds = array<i64: 1, 128>}, {transform_indices = @transform_3, window_bounds = array<i64: 1, 16, 128>}]} {
    %c0 = arith.constant 0 : index
    %c0_0 = arith.constant 0 : index
    %c0_1 = arith.constant 0 : index
    %0 = vector.load %arg1[%c0, %c0_0, %c0_1] : memref<1x16x216xbf16, #tpu.memory_space<vmem>>, vector<1x16x216xbf16>
    %1 = vector.shape_cast %0 : vector<1x16x216xbf16> to vector<16x216xbf16>
    %c0_2 = arith.constant 0 : index
    %c0_3 = arith.constant 0 : index
    %2 = vector.load %arg2[%c0_2, %c0_3] : memref<216x128xbf16, #tpu.memory_space<vmem>>, vector<216x128xbf16>
    %cst = arith.constant dense<0.000000e+00> : vector<16x128xf32>
    %3 = tpu.matmul %1, %2, %cst {dimension_numbers = #tpu.dot_dimension_numbers<[1], [0], [0], [1], [0, 0, 1, 1], [], []>} : vector<16x216xbf16>, vector<216x128xbf16>, vector<16x128xf32> -> vector<16x128xf32>
    %c0_4 = arith.constant 0 : index
    %c0_5 = arith.constant 0 : index
    %4 = vector.load %arg3[%c0_4, %c0_5] : memref<1x128xf32, #tpu.memory_space<vmem>>, vector<1x128xf32>
    %5 = vector.broadcast %4 : vector<1x128xf32> to vector<16x128xf32>
    %6 = arith.addf %3, %5 : vector<16x128xf32>
    %7 = vector.shape_cast %6 : vector<16x128xf32> to vector<1x16x128xf32>
    %c0_6 = arith.constant 0 : index
    %c0_7 = arith.constant 0 : index
    %c0_8 = arith.constant 0 : index
    %8 = vector.load %arg4[%c0_6, %c0_7, %c0_8] : memref<1x16x128xf32, #tpu.memory_space<vmem>>, vector<1x16x128xf32>
    tpu.vector_store %arg4[%c0_6, %c0_7, %c0_8], %7 {strides = array<i32>} : memref<1x16x128xf32, #tpu.memory_space<vmem>>, vector<1x16x128xf32>,
    return
  }
  func.func @transform_0(%arg0: i32) -> (i32, i32, i32) {
    %c0_i32 = arith.constant 0 : i32
    %c0_i32_0 = arith.constant 0 : i32
    %c0_i32_1 = arith.constant 0 : i32
    return %arg0, %c0_i32, %c0_i32_0 : i32, i32, i32
  }
  func.func @transform_1(%arg0: i32) -> (i32, i32) {
    %c0_i32 = arith.constant 0 : i32
    %c0_i32_0 = arith.constant 0 : i32
    %c0_i32_1 = arith.constant 0 : i32
    return %c0_i32, %c0_i32_0 : i32, i32
  }
  func.func @transform_2(%arg0: i32) -> (i32, i32) {
    %c0_i32 = arith.constant 0 : i32
    %c0_i32_0 = arith.constant 0 : i32
    %c0_i32_1 = arith.constant 0 : i32
    return %c0_i32, %c0_i32_0 : i32, i32
  }
  func.func @transform_3(%arg0: i32) -> (i32, i32, i32) {
    %c0_i32 = arith.constant 0 : i32
    %c0_i32_0 = arith.constant 0 : i32
    %c0_i32_1 = arith.constant 0 : i32
    return %arg0, %c0_i32, %c0_i32_0 : i32, i32, i32
  }
}

</mosaic_0001>

<llo_original>
// kernel: tile.8
$region0: #{tile.8}
  #allocation0 [shape = 's32[1]{0}', space=sflag, size = 0x4, scoped, tag = 'scoped memory for tile.8']
  %s0 = inlined_call_operand.vmem [shape: f32[8], index: 0, kind: input, shape index: {}]
  %s1 = inlined_call_operand.vmem [shape: f32[16,8], index: 1, kind: output, shape index: {}]
  // Predicated region
  $region2: #{tile.8} parent=0 // pred_check
    _
  $region3: #{tile.8} parent=0 // pred_check_branch
    %3 = sbr.rel (0) target = $region5
  $region4: #{tile.8} parent=0 // pred_region
    _
  $region5: #{tile.8} parent=0 // pred_fallthru
    _
  %v4 = vld [vmem:[%s0] ss:$0 sm:$0xff]
  %5 = vst [vmem:[%s1] sm:$0xff] %v4
  %s6 = scalar_lea.vmem %s1, 8
  %7 = vst [vmem:[%s6] sm:$0xff] %v4

// kernel: tile.9
$region0: #{tile.9}
  %s0 = inlined_call_operand.vmem [shape: f32[16,8], index: 0, kind: input, shape index: {}]
  %s1 = inlined_call_operand.vmem [shape: f32[1,128], index: 1, kind: output, shape index: {}]
  $region1: #{tile.9} parent=0
    #allocation0 [shape = 'u8[4096]{0}', space=vmem, size = 0x1000, scoped, tag = 'scoped mem for output reshape']
    %v2 = vld [vmem:[%s0] sm:$0x1]
    %vm3 = vcmask 64512
    %4 = vst.msk [vmem:[#allocation0] sm:$0x1] %vm3, %v2
    %s5 = scalar_lea.vmem %s0, 15
    %v6 = vld [vmem:[%s5] sm:$0x1]
    %7 = vrot.lane.b32.xlu0 %v6, 120
    %v8 = vpop.permute.xlu0 %7
    %vm9 = vcmask 1048512
    %10 = vst.msk [vmem:[#allocation0] sm:$0x1] %vm9, %v8
    %s11 = scalar_lea.vmem %s0, 14
    %v12 = vld [vmem:[%s11] sm:$0x1]
    %13 = vrot.lane.b32.xlu0 %v12, 112
    %v14 = vpop.permute.xlu0 %13
    %vm15 = vcmask 982912
    %16 = vst.msk [vmem:[#allocation0] sm:$0x1] %vm15, %v14
    %s17 = scalar_lea.vmem %s0, 13
    %v18 = vld [vmem:[%s17] sm:$0x1]
    %19 = vrot.lane.b32.xlu0 %v18, 104
    %v20 = vpop.permute.xlu0 %19
    %vm21 = vcmask 917312
    %22 = vst.msk [vmem:[#allocation0] sm:$0x1] %vm21, %v20
    %s23 = scalar_lea.vmem %s0, 12
    %v24 = vld [vmem:[%s23] sm:$0x1]
    %25 = vrot.lane.b32.xlu0 %v24, 96
    %v26 = vpop.permute.xlu0 %25
    %vm27 = vcmask 851712
    %28 = vst.msk [vmem:[#allocation0] sm:$0x1] %vm27, %v26
    %s29 = scalar_lea.vmem %s0, 11
    %v30 = vld [vmem:[%s29] sm:$0x1]
    %31 = vrot.lane.b32.xlu0 %v30, 88
    %v32 = vpop.permute.xlu0 %31
    %vm33 = vcmask 786112
    %34 = vst.msk [vmem:[#allocation0] sm:$0x1] %vm33, %v32
    %s35 = scalar_lea.vmem %s0, 10
    %v36 = vld [vmem:[%s35] sm:$0x1]
    %37 = vrot.lane.b32.xlu0 %v36, 80
    %v38 = vpop.permute.xlu0 %37
    %vm39 = vcmask 720512
    %40 = vst.msk [vmem:[#allocation0] sm:$0x1] %vm39, %v38
    %s41 = scalar_lea.vmem %s0, 9
    %v42 = vld [vmem:[%s41] sm:$0x1]
    %43 = vrot.lane.b32.xlu0 %v42, 72
    %v44 = vpop.permute.xlu0 %43
    %vm45 = vcmask 654912
    %46 = vst.msk [vmem:[#allocation0] sm:$0x1] %vm45, %v44
    %s47 = scalar_lea.vmem %s0, 8
    %v48 = vld [vmem:[%s47] sm:$0x1]
    %49 = vrot.lane.b32.xlu0 %v48, 64
    %v50 = vpop.permute.xlu0 %49
    %vm51 = vcmask 589312
    %52 = vst.msk [vmem:[#allocation0] sm:$0x1] %vm51, %v50
    %s53 = scalar_lea.vmem %s0, 7
    %v54 = vld [vmem:[%s53] sm:$0x1]
    %55 = vrot.lane.b32.xlu0 %v54, 56
    %v56 = vpop.permute.xlu0 %55
    %vm57 = vcmask 523712
    %58 = vst.msk [vmem:[#allocation0] sm:$0x1] %vm57, %v56
    %s59 = scalar_lea.vmem %s0, 6
    %v60 = vld [vmem:[%s59] sm:$0x1]
    %61 = vrot.lane.b32.xlu0 %v60, 48
    %v62 = vpop.permute.xlu0 %61
    %vm63 = vcmask 458112
    %64 = vst.msk [vmem:[#allocation0] sm:$0x1] %vm63, %v62
    %s65 = scalar_lea.vmem %s0, 5
    %v66 = vld [vmem:[%s65] sm:$0x1]
    %67 = vrot.lane.b32.xlu0 %v66, 40
    %v68 = vpop.permute.xlu0 %67
    %vm69 = vcmask 392512
    %70 = vst.msk [vmem:[#allocation0] sm:$0x1] %vm69, %v68
    %s71 = scalar_lea.vmem %s0, 4
    %v72 = vld [vmem:[%s71] sm:$0x1]
    %73 = vrot.lane.b32.xlu0 %v72, 32
    %v74 = vpop.permute.xlu0 %73
    %vm75 = vcmask 326912
    %76 = vst.msk [vmem:[#allocation0] sm:$0x1] %vm75, %v74
    %s77 = scalar_lea.vmem %s0, 3
    %v78 = vld [vmem:[%s77] sm:$0x1]
    %79 = vrot.lane.b32.xlu0 %v78, 24
    %v80 = vpop.permute.xlu0 %79
    %vm81 = vcmask 261312
    %82 = vst.msk [vmem:[#allocation0] sm:$0x1] %vm81, %v80
    %s83 = scalar_lea.vmem %s0, 2
    %v84 = vld [vmem:[%s83] sm:$0x1]
    %85 = vrot.lane.b32.xlu0 %v84, 16
    %v86 = vpop.permute.xlu0 %85
    %vm87 = vcmask 195712
    %88 = vst.msk [vmem:[#allocation0] sm:$0x1] %vm87, %v86
    %s89 = scalar_lea.vmem %s0, 1
    %v90 = vld [vmem:[%s89] sm:$0x1]
    %91 = vrot.lane.b32.xlu0 %v90, 8
    %v92 = vpop.permute.xlu0 %91
    %vm93 = vcmask 130112
    %94 = vst.msk [vmem:[#allocation0] sm:$0x1] %vm93, %v92
    %s96 = sshllo.u32 0, 1
    %v98 = vld [vmem:[#allocation0] sm:%s96]
    %s99 = sshllo.u32 0, 1
    %100 = vst [vmem:[%s1] sm:%s99] %v98

// kernel: snconv_forward.1
$region0: #{snconv_forward.1}
  #allocation0 [shape = 'u32[]', space=smem, size = 0x4, offset = 0x4, fixed_abs, tag = 'smem constant byte address 0x4 - core index']
  #allocation1 [shape = 'u32[144,128]{1,0:T(1,128)}', space=vmem, size = 0x12000, scoped, tag = 'internal scratch']
  %s0 = inlined_call_operand.vmem [shape: bf16[2,16,216], index: 0, kind: input, shape index: {}]
  %s1 = inlined_call_operand.vmem [shape: bf16[216,128], index: 1, kind: input, shape index: {}]
  %s2 = inlined_call_operand.vmem [shape: f32[1,128], index: 2, kind: input, shape index: {}]
  %s3 = inlined_call_operand.vmem [shape: f32[2,16,128], index: 3, kind: output, shape index: {}]
  %s4 = sld [smem:[#allocation0]]
  $region45: #{snconv_forward.1} parent=0
    _
  %s6 = ssub.s32 1, %s4
  %s7 = scalar_select 0, %s6, %s4
  loop: start=0, step=1, limit=4
  $region2: #{snconv_forward.1} parent=0 // loop_pre_header
    _
  $region3: #{snconv_forward.1} parent=0 // loop_header
    %s9 = sphi 0, %s13
    %p10 = scmp.ge.s32.totalorder %s9, 4
    %s19 = sphi 0, %s21
    %s22 = sphi 0, %s19
    %s23 = sphi 0, %s22
    %s39 = sphi 0, %s23
    %s43 = sphi 0, %s43
    %s45 = sphi 0, %s43
    %s46 = sphi 0, %s45
    %s60 = sphi 0, %s46
    %s64 = sphi 0, %s64
    %s66 = sphi 0, %s64
    %s67 = sphi 0, %s66
    %s81 = sphi 0, %s67
    %s87 = sphi 0, %s89
    %s90 = sphi 0, %s87
    %s91 = sphi 0, %s90
    %s107 = sphi 0, %s91
  $region4: #{snconv_forward.1} parent=0 // loop_header_branch
    %12 = sbr.rel (%p10) target = $region8
  $region5: #{snconv_forward.1} parent=0 // loop_body
    %s14 = ssub.s32 %s9, 1
    %s15 = ssub.s32 %s9, 2
    %s16 = sadd.s32 %s9, 1
    %s17 = ssub.s32 %s9, %s16
    %p18 = scmp.eq.s32.totalorder %s17, 0
    %s20 = sadd.s32 %s19, 1
    %s21 = scalar_select %p18, %s19, %s20
    %p24 = pneg %p18
    %p25 = scmp.eq.s32.totalorder %s9, 1
    %p26 = por %p24, %p25
    %p27 = scmp.ne.s32.totalorder %s19, %s22
    %p28 = scmp.eq.s32.totalorder %s9, 0
    %p29 = por %p27, %p28
    %p30 = scmp.ne.s32.totalorder %s19, %s22
    %p31 = scmp.eq.s32.totalorder %s14, 1
    %p32 = por %p30, %p31
    %p33 = scmp.ne.s32.totalorder %s22, %s23
    %p34 = scmp.eq.s32.totalorder %s14, 0
    %p35 = por %p33, %p34
    %p36 = scmp.ne.s32.totalorder %s22, %s23
    %p37 = scmp.eq.s32.totalorder %s15, 1
    %p38 = por %p36, %p37
    %p40 = scmp.ne.s32.totalorder %s23, %s39
    %p41 = scmp.eq.s32.totalorder %s15, 0
    %p42 = por %p40, %p41
    %s44 = sadd.s32 %s43, 1
    %p47 = scmp.eq.s32.totalorder %s9, 1
    %p48 = scmp.ne.s32.totalorder %s43, %s45
    %p49 = scmp.eq.s32.totalorder %s9, 0
    %p50 = por %p48, %p49
    %p51 = scmp.ne.s32.totalorder %s43, %s45
    %p52 = scmp.eq.s32.totalorder %s14, 1
    %p53 = por %p51, %p52
    %p54 = scmp.ne.s32.totalorder %s45, %s46
    %p55 = scmp.eq.s32.totalorder %s14, 0
    %p56 = por %p54, %p55
    %p57 = scmp.ne.s32.totalorder %s45, %s46
    %p58 = scmp.eq.s32.totalorder %s15, 1
    %p59 = por %p57, %p58
    %p61 = scmp.ne.s32.totalorder %s46, %s60
    %p62 = scmp.eq.s32.totalorder %s15, 0
    %p63 = por %p61, %p62
    %s65 = sadd.s32 %s64, 1
    %p68 = scmp.eq.s32.totalorder %s9, 1
    %p69 = scmp.ne.s32.totalorder %s64, %s66
    %p70 = scmp.eq.s32.totalorder %s9, 0
    %p71 = por %p69, %p70
    %p72 = scmp.ne.s32.totalorder %s64, %s66
    %p73 = scmp.eq.s32.totalorder %s14, 1
    %p74 = por %p72, %p73
    %p75 = scmp.ne.s32.totalorder %s66, %s67
    %p76 = scmp.eq.s32.totalorder %s14, 0
    %p77 = por %p75, %p76
    %p78 = scmp.ne.s32.totalorder %s66, %s67
    %p79 = scmp.eq.s32.totalorder %s15, 1
    %p80 = por %p78, %p79
    %p82 = scmp.ne.s32.totalorder %s67, %s81
    %p83 = scmp.eq.s32.totalorder %s15, 0
    %p84 = por %p82, %p83
    %s85 = ssub.s32 %s9, %s16
    %p86 = scmp.eq.s32.totalorder %s85, 0
    %s88 = sadd.s32 %s87, 1
    %s89 = scalar_select %p86, %s87, %s88
    %p92 = pneg %p86
    %p93 = scmp.eq.s32.totalorder %s9, 1
    %p94 = por %p92, %p93
    %p95 = scmp.ne.s32.totalorder %s87, %s90
    %p96 = scmp.eq.s32.totalorder %s9, 0
    %p97 = por %p95, %p96
    %p98 = scmp.ne.s32.totalorder %s87, %s90
    %p99 = scmp.eq.s32.totalorder %s14, 1
    %p100 = por %p98, %p99
    %p101 = scmp.ne.s32.totalorder %s90, %s91
    %p102 = scmp.eq.s32.totalorder %s14, 0
    %p103 = por %p101, %p102
    %p104 = scmp.ne.s32.totalorder %s90, %s91
    %p105 = scmp.eq.s32.totalorder %s15, 1
    %p106 = por %p104, %p105
    %p108 = scmp.ne.s32.totalorder %s91, %s107
    %p109 = scmp.eq.s32.totalorder %s15, 0
    %p110 = por %p108, %p109
    %p111 = scmp.le.s32.totalorder 1, %s9
    %p112 = scmp.lt.s32.totalorder %s9, 3
    %p113 = pnand %p111, %p112
    %p114 = pneg %p113
    // Predicated region
    $region9: #{snconv_forward.1} parent=5 // pred_check
      _
    $region10: #{snconv_forward.1} parent=5 // pred_check_branch
      %116 = sbr.rel (%p113) target = $region12
    $region11: #{snconv_forward.1} parent=5 // pred_region
      %s117 = ssub.s32 %s9, 1
      // Predicated region
      $region13: #{snconv_forward.1} parent=11 // pred_check
        %p118 = pneg %p56
      $region14: #{snconv_forward.1} parent=11 // pred_check_branch
        %120 = sbr.rel (%p118) target = $region16
      $region15: #{snconv_forward.1} parent=11 // pred_region
        _
      $region16: #{snconv_forward.1} parent=11 // pred_fallthru
        _
      // Predicated region
      $region17: #{snconv_forward.1} parent=11 // pred_check
        %p121 = pneg %p77
      $region18: #{snconv_forward.1} parent=11 // pred_check_branch
        %123 = sbr.rel (%p121) target = $region20
      $region19: #{snconv_forward.1} parent=11 // pred_region
        _
      $region20: #{snconv_forward.1} parent=11 // pred_fallthru
        _
    $region12: #{snconv_forward.1} parent=5 // pred_fallthru
      _
    %p124 = scmp.lt.s32.totalorder %s9, 2
    // Predicated region
    $region21: #{snconv_forward.1} parent=5 // pred_check
      %p125 = pneg %p124
    $region22: #{snconv_forward.1} parent=5 // pred_check_branch
      %127 = sbr.rel (%p125) target = $region24
    $region23: #{snconv_forward.1} parent=5 // pred_region
      // Predicated region
      $region25: #{snconv_forward.1} parent=23 // pred_check
        %p128 = pneg %p29
      $region26: #{snconv_forward.1} parent=23 // pred_check_branch
        %130 = sbr.rel (%p128) target = $region28
      $region27: #{snconv_forward.1} parent=23 // pred_region
        %p131 = scmp.lt.s32.totalorder %s9, 1
        %s132 = scalar_select %p131, %s9, 1
        %s133 = smul.addr %s132, 4
        %s134 = smul.addr %s133, 4
        %s135 = scalar_lea.vmem %s0, %s134
      $region28: #{snconv_forward.1} parent=23 // pred_fallthru
        _
    $region24: #{snconv_forward.1} parent=5 // pred_fallthru
      _
    %p136 = scmp.le.s32.totalorder 1, %s9
    %p137 = scmp.lt.s32.totalorder %s9, 3
    %p138 = pnand %p136, %p137
    %p139 = pneg %p138
    // Predicated region
    $region29: #{snconv_forward.1} parent=5 // pred_check
      _
    $region30: #{snconv_forward.1} parent=5 // pred_check_branch
      %141 = sbr.rel (%p138) target = $region32
    $region31: #{snconv_forward.1} parent=5 // pred_region
      %s142 = ssub.s32 %s9, 1
      %p143 = scmp.lt.s32.totalorder %s14, 1
      %s144 = scalar_select %p143, %s14, 1
      %s145 = smul.addr %s144, 4
      %s146 = smul.addr %s145, 4
      %s147 = scalar_lea.vmem %s0, %s146
      %p148 = pneg %p35
      %p149 = pneg %p32
      %p150 = pneg %p56
      %p151 = pneg %p53
      %p152 = pneg %p77
      %p153 = pneg %p74
      %p154 = pneg %p103
      %p155 = pneg %p100
      %p156 = scmp.lt.s32.totalorder %s14, 1
      %s157 = scalar_select %p156, %s14, 1
      %s158 = smul.addr %s157, 2
      %s159 = smul.addr %s158, 8
      %s160 = scalar_lea.vmem %s3, %s159
      %p161 = scmp.lt.s32.totalorder %s14, 1
      %s162 = scalar_select %p161, %s14, 1
      %s163 = smul.addr %s162, 4
      %s164 = smul.addr %s163, 4
      %s165 = scalar_lea.vmem %s0, %s164
      %p166 = scmp.lt.s32.totalorder %s14, 1
      %s167 = scalar_select %p166, %s14, 1
      %s168 = smul.addr %s167, 2
      %s169 = smul.addr %s168, 8
      %s170 = scalar_lea.vmem %s3, %s169
      %v172 = vld [vmem:[%s165] sm:$0xff]
      %v173 = vld [vmem:[%s165 + $0x8] sm:$0xff]
      %v174 = vld [vmem:[%s1] sm:$0xf]
      %v175 = vld [vmem:[%s1 + $0x4] sm:$0xf]
      %v176 = vld [vmem:[%s1 + $0x8] sm:$0xf]
      %v177 = vld [vmem:[%s1 + $0xc] sm:$0xf]
      %v178 = vld [vmem:[%s1 + $0x10] sm:$0xf]
      %v179 = vld [vmem:[%s1 + $0x14] sm:$0xf]
      %v180 = vld [vmem:[%s1 + $0x18] sm:$0xf]
      %v181 = vld [vmem:[%s1 + $0x1c] sm:$0xf]
      %v182 = vld [vmem:[%s1 + $0x20] sm:$0xf]
      %v183 = vld [vmem:[%s1 + $0x24] sm:$0xf]
      %v184 = vld [vmem:[%s1 + $0x28] sm:$0xf]
      %v185 = vld [vmem:[%s1 + $0x2c] sm:$0xf]
      %v186 = vld [vmem:[%s1 + $0x30] sm:$0xf]
      %v187 = vld [vmem:[%s1 + $0x34] sm:$0xf]
      %v188 = vld [vmem:[%s1 + $0x38] sm:$0xf]
      %v189 = vld [vmem:[%s1 + $0x3c] sm:$0xf]
      %v190 = vld [vmem:[%s1 + $0x40] sm:$0xf]
      %v191 = vld [vmem:[%s1 + $0x44] sm:$0xf]
      %v192 = vld [vmem:[%s1 + $0x48] sm:$0xf]
      %v193 = vld [vmem:[%s1 + $0x4c] sm:$0xf]
      %v194 = vld [vmem:[%s1 + $0x50] sm:$0xf]
      %v195 = vld [vmem:[%s1 + $0x54] sm:$0xf]
      %v196 = vld [vmem:[%s1 + $0x58] sm:$0xf]
      %v197 = vld [vmem:[%s1 + $0x5c] sm:$0xf]
      %v198 = vld [vmem:[%s1 + $0x60] sm:$0xf]
      %v199 = vld [vmem:[%s1 + $0x64] sm:$0xf]
      %v200 = vld [vmem:[%s1 + $0x68] sm:$0xf]
      %v201 = vld [vmem:[%s2] sm:$0x1]
      %v203 = vlaneseq
      %v204 = vshrl.u32 %v203, 7
      %v205 = vsub.s32 0, %v204
      %v206 = vrot.slane %v201, %v205
      %v210 = vunpack.c.l.b16 %v172
      %v211 = vunpack.c.h.b16 %v172
      %v212 = vunpack.c.l.b16 %v173
      %v213 = vunpack.c.h.b16 %v173
      %v214 = vpack.c.b16 %v212, %v210
      %v215 = vpack.c.b16 %v213, %v211
      %v244 = vunpack.c.l.b16 %v174
      %v245 = vunpack.c.l.b16 %v175
      %v246 = vunpack.c.l.b16 %v176
      %v247 = vunpack.c.l.b16 %v177
      %v248 = vunpack.c.l.b16 %v178
      %v249 = vunpack.c.l.b16 %v179
      %v250 = vunpack.c.l.b16 %v180
      %v251 = vunpack.c.l.b16 %v181
      %v252 = vunpack.c.l.b16 %v182
      %v253 = vunpack.c.l.b16 %v183
      %v254 = vunpack.c.l.b16 %v184
      %v255 = vunpack.c.l.b16 %v185
      %v256 = vunpack.c.l.b16 %v186
      %v257 = vunpack.c.l.b16 %v187
      %v258 = vunpack.c.l.b16 %v188
      %v259 = vunpack.c.l.b16 %v189
      %v260 = vunpack.c.l.b16 %v190
      %v261 = vunpack.c.l.b16 %v191
      %v262 = vunpack.c.l.b16 %v192
      %v263 = vunpack.c.l.b16 %v193
      %v264 = vunpack.c.l.b16 %v194
      %v265 = vunpack.c.l.b16 %v195
      %v266 = vunpack.c.l.b16 %v196
      %v267 = vunpack.c.l.b16 %v197
      %v268 = vunpack.c.l.b16 %v198
      %v269 = vunpack.c.l.b16 %v199
      %v270 = vunpack.c.l.b16 %v200
      %v271 = vpack.c.b16 %v245, %v244
      %v272 = vpack.c.b16 %v247, %v246
      %v273 = vpack.c.b16 %v249, %v248
      %v274 = vpack.c.b16 %v251, %v250
      %v275 = vpack.c.b16 %v253, %v252
      %v276 = vpack.c.b16 %v255, %v254
      %v277 = vpack.c.b16 %v257, %v256
      %v278 = vpack.c.b16 %v259, %v258
      %v279 = vpack.c.b16 %v261, %v260
      %v280 = vpack.c.b16 %v263, %v262
      %v281 = vpack.c.b16 %v265, %v264
      %v282 = vpack.c.b16 %v267, %v266
      %v283 = vpack.c.b16 %v269, %v268
      %v284 = vpack.c.b16 %v270, %v270
      %vm298 = vcmask 719872
      %v300 = vsel %vm298, %v215, 0
      %vm302 = vcmask 1043456
      %v304 = vsel %vm302, %v284, 0
      %306 = vmatprep.subr.bf16.mxu0 0
      %307 = vmatpush1.bf16.msra.mxu0 %v271
      %308 = vmatprep.subr.bf16.mxu0 0
      %309 = vmatpush1.bf16.msra.mxu0 %v272
      %310 = vmatprep.subr.bf16.mxu0 0
      %311 = vmatpush1.bf16.msra.mxu0 %v273
      %312 = vmatprep.subr.bf16.mxu0 0
      %313 = vmatpush1.bf16.msra.mxu0 %v274
      %314 = vmatprep.subr.bf16.mxu0 0
      %315 = vmatpush1.bf16.msra.mxu0 %v275
      %316 = vmatprep.subr.bf16.mxu0 0
      %317 = vmatpush1.bf16.msra.mxu0 %v276
      %318 = vmatprep.subr.bf16.mxu0 0
      %319 = vmatpush1.bf16.msra.mxu0 %v277
      %320 = vmatprep.subr.bf16.mxu0 0
      %321 = vmatpush1.bf16.msra.mxu0 %v278
      %322 = vmatprep.subr.bf16.mxu0 0
      %323 = vmatpush1.bf16.msra.mxu0 %v279
      %324 = vmatprep.subr.bf16.mxu0 0
      %325 = vmatpush1.bf16.msra.mxu0 %v280
      %326 = vmatprep.subr.bf16.mxu0 0
      %327 = vmatpush1.bf16.msra.mxu0 %v281
      %328 = vmatprep.subr.bf16.mxu0 0
      %329 = vmatpush1.bf16.msra.mxu0 %v282
      %330 = vmatprep.subr.bf16.mxu0 0
      %331 = vmatpush1.bf16.msra.mxu0 %v283
      %332 = vmatprep.subr.bf16.mxu0 0
      %333 = vmatpush1.bf16.msra.mxu0 %v304
      %334 = vmatprep.subr.bf16.mxu0 0
      %335 = vmatpush1.bf16.msra.mxu0 0
      %336 = vmatprep.subr.bf16.mxu0 0
      %337 = vmatpush1.bf16.msra.mxu0 0
      %338 = vmatprep.mubr.bf16.mxu0 %v300
      %339 = vmatmul.mubr.bf16.gmra.mrb[0].mxu0 %v214
      %v340 = vpop.f32.mrb[0].mxu0
      %v341 = vadd.f32 %v206, %v340
      %v342 = vpop.f32.mrb[0].mxu0
      %v343 = vpop.f32.mrb[0].mxu0
      %v344 = vadd.f32 %v206, %v343
      %v345 = vpop.f32.mrb[0].mxu0
      %346 = vdwg.mxu0
      %347 = vst [vmem:[%s170] sm:$0xff] %v341
      %348 = vst [vmem:[%s170 + $0x8] sm:$0xff] %v344
      %p349 = scmp.lt.s32.totalorder %s14, 1
      %s350 = scalar_select %p349, %s14, 1
      %s351 = smul.addr %s350, 2
      %s352 = smul.addr %s351, 8
      %s353 = scalar_lea.vmem %s3, %s352
      // Predicated region
      $region33: #{snconv_forward.1} parent=31 // pred_check
        %p354 = pneg %p100
      $region34: #{snconv_forward.1} parent=31 // pred_check_branch
        %356 = sbr.rel (%p354) target = $region36
      $region35: #{snconv_forward.1} parent=31 // pred_region
        _
      $region36: #{snconv_forward.1} parent=31 // pred_fallthru
        _
    $region32: #{snconv_forward.1} parent=5 // pred_fallthru
      _
    %p357 = scmp.le.s32.totalorder 2, %s9
    // Predicated region
    $region37: #{snconv_forward.1} parent=5 // pred_check
      %p358 = pneg %p357
    $region38: #{snconv_forward.1} parent=5 // pred_check_branch
      %360 = sbr.rel (%p358) target = $region40
    $region39: #{snconv_forward.1} parent=5 // pred_region
      %s361 = ssub.s32 %s9, 2
      // Predicated region
      $region41: #{snconv_forward.1} parent=39 // pred_check
        %p362 = pneg %p106
      $region42: #{snconv_forward.1} parent=39 // pred_check_branch
        %364 = sbr.rel (%p362) target = $region44
      $region43: #{snconv_forward.1} parent=39 // pred_region
        %p365 = scmp.lt.s32.totalorder %s15, 1
        %s366 = scalar_select %p365, %s15, 1
        %s367 = smul.addr %s366, 2
        %s368 = smul.addr %s367, 8
        %s369 = scalar_lea.vmem %s3, %s368
      $region44: #{snconv_forward.1} parent=39 // pred_fallthru
        _
    $region40: #{snconv_forward.1} parent=5 // pred_fallthru
      _
  $region6: #{snconv_forward.1} parent=0 // loop_footer
    %s13 = sadd.s32 1, %s9
  $region7: #{snconv_forward.1} parent=0 // loop_footer_branch
    %8 = sbr.rel target = $region3
  $region8: #{snconv_forward.1} parent=0 // loop_exit
    _

</llo_original>
